<compile_context>
chip_gen: v6e
topology: v6e:2x2x1
jax: 0.10.0
libtpu: 0.0.40
codegen_flags: <defaults>
</compile_context>

<pallas_src>
import jax
import jax.numpy as jnp
from jax.experimental import pallas as pl
from jax.experimental.pallas import tpu as pltpu

EPS = 1e-5


def layernorm_kernel(x_ref, scale_ref, shift_ref, o_ref):
    # x_ref: (tile_rows, emb_dim); scale_ref/shift_ref: (1, emb_dim) resident
    # blocks (constant index_map). All math in f32 regardless of input dtype.
    x = x_ref[...].astype(jnp.float32)
    inv_d = jnp.float32(1.0 / x.shape[-1])

    # Two-pass variance: mean first, then E[(x-mean)^2] — matches
    # torch.var(unbiased=False) and avoids catastrophic cancellation.
    mean = jnp.sum(x, axis=-1, keepdims=True) * inv_d
    xc = x - mean
    var = jnp.sum(xc * xc, axis=-1, keepdims=True) * inv_d
    inv_std = jax.lax.rsqrt(var + EPS)

    # Hoisted f32 casts of scale/shift, broadcast exactly once each.
    scale = scale_ref[...].astype(jnp.float32)
    shift = shift_ref[...].astype(jnp.float32)

    o_ref[...] = (xc * inv_std * scale + shift).astype(o_ref.dtype)


def _round_up(x, m):
    return ((x + m - 1) // m) * m


def _tpu_generation():
    """Best-effort (vmem_per_core_bytes, tensorcores_per_chip)."""
    vmem = None
    try:
        info = pltpu.get_tpu_info()
        for attr in ("vmem_capacity_bytes", "vmem_size_bytes"):
            v = getattr(info, attr, None)
            if v:
                vmem = int(v)
                break
    except Exception:
        pass
    kind = ""
    try:
        kind = jax.devices()[0].device_kind.lower()
    except Exception:
        pass
    is_v7 = ("v7" in kind) or ("tpu7" in kind) or (
        vmem is not None and vmem <= (64 << 20))
    if vmem is None:
        # Unknown generation: assume the tighter v7x budget (also valid,
        # merely slightly conservative, on v5e/v6e).
        vmem = (64 << 20) if is_v7 else (128 << 20)
    num_tc = 2 if is_v7 else 1
    return vmem, num_tc


def _pick_tiling(rows, emb_dim, dtype_bytes, vmem_per_core, num_tc,
                 tile_rows=None):
    """Choose (tile_rows, vmem_limit_bytes) from a per-generation VMEM target.

    Working set per row of tile: 2x(in)+2x(out) double buffers in the input
    dtype plus ~3 f32 intermediates (x_f32, centered, y) inside the kernel.
    """
    sublane = 8 * (4 // dtype_bytes)          # 8 for f32, 16 for bf16, 32 for i8
    headroom = 4 << 20
    if vmem_per_core <= (64 << 20):           # v7x: 64 MiB per TensorCore
        scoped_target, scoped_cap = (40 << 20), (44 << 20)
    else:                                     # v5e/v6e: 128 MiB physical VMEM
        scoped_target, scoped_cap = (56 << 20), (64 << 20)

    rows_padded = _round_up(rows, sublane)

    if tile_rows is None:
        per_row = emb_dim * (4 * dtype_bytes + 3 * 4)
        t = (scoped_target - headroom) // max(1, per_row)
        t = max(sublane, (t // sublane) * sublane)
        t = min(t, rows_padded)
        # Megacore (v7x): keep >= 2*num_tc grid steps so both TCs get work,
        # unless the problem is too small to split.
        if num_tc > 1 and rows_padded > sublane * num_tc:
            target_steps = 2 * num_tc
            cap_rows = _round_up(-(-rows_padded // target_steps), sublane)
            t = min(t, max(cap_rows, sublane))
        tile_rows = max(t, sublane)
    else:
        tile_rows = max(sublane, min(_round_up(tile_rows, sublane), rows_padded))

    need = (4 * tile_rows * emb_dim * dtype_bytes   # in+out, double-buffered
            + 3 * tile_rows * emb_dim * 4           # f32 intermediates
            + 4 * emb_dim * 4                       # scale/shift blocks
            + headroom)
    vmem_limit = int(min(max(need, 16 << 20), scoped_cap))
    return tile_rows, vmem_limit


def layer_norm(x, scale, shift, *, tile_rows=None):
    """LayerNorm over the last axis of x, matching the PyTorch module."""
    orig_shape = x.shape
    emb_dim = orig_shape[-1]
    rows = 1
    for d in orig_shape[:-1]:
        rows *= d
    x2 = x.reshape(rows, emb_dim)

    dtype_bytes = jnp.dtype(x.dtype).itemsize
    vmem_per_core, num_tc = _tpu_generation()
    tile_rows, vmem_limit = _pick_tiling(
        rows, emb_dim, dtype_bytes, vmem_per_core, num_tc, tile_rows=tile_rows)

    scale2 = scale.reshape(1, emb_dim)
    shift2 = shift.reshape(1, emb_dim)

    # cdiv grid: no input padding; Pallas masks the partial last block.
    grid = (pl.cdiv(rows, tile_rows),)

    out = pl.pallas_call(
        layernorm_kernel,
        out_shape=jax.ShapeDtypeStruct((rows, emb_dim), x.dtype),
        grid_spec=pltpu.PrefetchScalarGridSpec(
            num_scalar_prefetch=0,
            grid=grid,
            in_specs=[
                pl.BlockSpec((tile_rows, emb_dim), lambda i: (i, 0)),
                pl.BlockSpec((1, emb_dim), lambda i: (0, 0)),
                pl.BlockSpec((1, emb_dim), lambda i: (0, 0)),
            ],
            out_specs=pl.BlockSpec((tile_rows, emb_dim), lambda i: (i, 0)),
        ),
        compiler_params=pltpu.CompilerParams(
            # Row axis is parallel (load-bearing for v7x's 2 TensorCores).
            dimension_semantics=("parallel",),
            vmem_limit_bytes=vmem_limit,
        ),
    )(x2, scale2, shift2)

    return out.reshape(orig_shape)


def _reference(x, scale, shift):
    mean = jnp.mean(x, axis=-1, keepdims=True)
    var = jnp.mean((x - mean) ** 2, axis=-1, keepdims=True)
    return scale * ((x - mean) / jnp.sqrt(var + EPS)) + shift


if __name__ == "__main__":
    key = jax.random.PRNGKey(0)
    batch, seq, emb_dim = 2, 8, 32

    x = jax.random.normal(key, (batch, seq, emb_dim), dtype=jnp.float32)
    # Deterministic params matching nn.Parameter(torch.ones/zeros(emb_dim)).
    scale = jnp.ones((emb_dim,), dtype=jnp.float32)
    shift = jnp.zeros((emb_dim,), dtype=jnp.float32)

    y = jax.block_until_ready(layer_norm(x, scale, shift))
    assert jnp.allclose(y, _reference(x, scale, shift), atol=1e-5, rtol=1e-5), \
        "mismatch vs reference"

    # Partial-last-block path: rows = 3*37 = 111 with tile_rows = 64.
    key2 = jax.random.PRNGKey(1)
    x2 = jax.random.normal(key2, (3, 37, emb_dim), dtype=jnp.float32)
    y2 = jax.block_until_ready(layer_norm(x2, scale, shift, tile_rows=64))
    assert jnp.allclose(y2, _reference(x2, scale, shift), atol=1e-5, rtol=1e-5), \
        "mismatch vs reference (partial block)"

    # Lane-dense path (emb_dim multiple of 128).
    key3 = jax.random.PRNGKey(2)
    emb3 = 256
    x3 = jax.random.normal(key3, (4, 8, emb3), dtype=jnp.float32)
    scale3 = jnp.ones((emb3,), dtype=jnp.float32)
    shift3 = jnp.zeros((emb3,), dtype=jnp.float32)
    y3 = jax.block_until_ready(layer_norm(x3, scale3, shift3))
    assert jnp.allclose(y3, _reference(x3, scale3, shift3), atol=1e-5, rtol=1e-5), \
        "mismatch vs reference (lane-dense)"

    print("KERNEL_OK")
</pallas_src>

<mosaic_0001>
module attributes {stable_mosaic.version = 11 : i64} {
  func.func @layernorm_kernel(%arg0: i32, %arg1: memref<16x32xf32, #tpu.memory_space<vmem>>, %arg2: memref<1x32xf32, #tpu.memory_space<vmem>>, %arg3: memref<1x32xf32, #tpu.memory_space<vmem>>, %arg4: memref<16x32xf32, #tpu.memory_space<vmem>>) attributes {dimension_semantics = [#tpu.dimension_semantics<parallel>], iteration_bounds = array<i64: 1>, scalar_prefetch = 0 : i64, scratch_operands = 0 : i64, tpu.core_type = #tpu.core_type<tc>, window_params = [{transform_indices = @transform_0, window_bounds = array<i64: 16, 32>}, {pipeline_mode = #tpu.pipeline_mode<synchronous>, transform_indices = @transform_1, window_bounds = array<i64: 1, 32>}, {pipeline_mode = #tpu.pipeline_mode<synchronous>, transform_indices = @transform_2, window_bounds = array<i64: 1, 32>}, {transform_indices = @transform_3, window_bounds = array<i64: 16, 32>}]} {
    %c0 = arith.constant 0 : index
    %c0_0 = arith.constant 0 : index
    %0 = vector.load %arg1[%c0, %c0_0] : memref<16x32xf32, #tpu.memory_space<vmem>>, vector<16x32xf32>
    %cst = arith.constant dense<0.000000e+00> : vector<16xf32>
    %1 = vector.multi_reduction <add>, %0, %cst [1] : vector<16x32xf32> to vector<16xf32>
    %2 = vector.shape_cast %1 : vector<16xf32> to vector<16x1xf32>
    %cst_1 = arith.constant 3.125000e-02 : f32
    %3 = vector.broadcast %cst_1 : f32 to vector<16x1xf32>
    %4 = arith.mulf %2, %3 : vector<16x1xf32>
    %5 = vector.broadcast %4 : vector<16x1xf32> to vector<16x32xf32>
    %6 = arith.subf %0, %5 : vector<16x32xf32>
    %7 = arith.mulf %6, %6 : vector<16x32xf32>
    %cst_2 = arith.constant dense<0.000000e+00> : vector<16xf32>
    %8 = vector.multi_reduction <add>, %7, %cst_2 [1] : vector<16x32xf32> to vector<16xf32>
    %9 = vector.shape_cast %8 : vector<16xf32> to vector<16x1xf32>
    %cst_3 = arith.constant 3.125000e-02 : f32
    %10 = vector.broadcast %cst_3 : f32 to vector<16x1xf32>
    %11 = arith.mulf %9, %10 : vector<16x1xf32>
    %cst_4 = arith.constant 9.99999974E-6 : f32
    %12 = vector.broadcast %cst_4 : f32 to vector<16x1xf32>
    %13 = arith.addf %11, %12 : vector<16x1xf32>
    %14 = math.rsqrt %13 : vector<16x1xf32>
    %c0_5 = arith.constant 0 : index
    %c0_6 = arith.constant 0 : index
    %15 = vector.load %arg2[%c0_5, %c0_6] : memref<1x32xf32, #tpu.memory_space<vmem>>, vector<1x32xf32>
    %c0_7 = arith.constant 0 : index
    %c0_8 = arith.constant 0 : index
    %16 = vector.load %arg3[%c0_7, %c0_8] : memref<1x32xf32, #tpu.memory_space<vmem>>, vector<1x32xf32>
    %17 = vector.broadcast %14 : vector<16x1xf32> to vector<16x32xf32>
    %18 = arith.mulf %6, %17 : vector<16x32xf32>
    %19 = vector.broadcast %15 : vector<1x32xf32> to vector<16x32xf32>
    %20 = arith.mulf %18, %19 : vector<16x32xf32>
    %21 = vector.broadcast %16 : vector<1x32xf32> to vector<16x32xf32>
    %22 = arith.addf %20, %21 : vector<16x32xf32>
    %c0_9 = arith.constant 0 : index
    %c0_10 = arith.constant 0 : index
    %23 = vector.load %arg4[%c0_9, %c0_10] : memref<16x32xf32, #tpu.memory_space<vmem>>, vector<16x32xf32>
    tpu.vector_store %arg4[%c0_9, %c0_10], %22 {strides = array<i32>} : memref<16x32xf32, #tpu.memory_space<vmem>>, vector<16x32xf32>,
    return
  }
  func.func @transform_0(%arg0: i32) -> (i32, i32) {
    %c0_i32 = arith.constant 0 : i32
    %c0_i32_0 = arith.constant 0 : i32
    return %arg0, %c0_i32 : i32, i32
  }
  func.func @transform_1(%arg0: i32) -> (i32, i32) {
    %c0_i32 = arith.constant 0 : i32
    %c0_i32_0 = arith.constant 0 : i32
    %c0_i32_1 = arith.constant 0 : i32
    return %c0_i32, %c0_i32_0 : i32, i32
  }
  func.func @transform_2(%arg0: i32) -> (i32, i32) {
    %c0_i32 = arith.constant 0 : i32
    %c0_i32_0 = arith.constant 0 : i32
    %c0_i32_1 = arith.constant 0 : i32
    return %c0_i32, %c0_i32_0 : i32, i32
  }
  func.func @transform_3(%arg0: i32) -> (i32, i32) {
    %c0_i32 = arith.constant 0 : i32
    %c0_i32_0 = arith.constant 0 : i32
    return %arg0, %c0_i32 : i32, i32
  }
}

</mosaic_0001>

<llo_original>
// kernel: tpu_custom_call.1
$region0: #{tpu_custom_call.1}
  #allocation0 [shape = 'u32[]', space=smem, size = 0x4, offset = 0x4, fixed_abs, tag = 'smem constant byte address 0x4 - core index']
  #allocation1 [shape = 'u32[144,128]{1,0:T(1,128)}', space=vmem, size = 0x12000, scoped, tag = 'internal scratch']
  %s0 = inlined_call_operand.hbm [shape: f32[16,32], index: 0, kind: input, shape index: {}]
  %s1 = inlined_call_operand.vmem [shape: f32[1,32], index: 1, kind: input, shape index: {}]
  %s2 = inlined_call_operand.vmem [shape: f32[1,32], index: 2, kind: input, shape index: {}]
  %s3 = inlined_call_operand.hbm [shape: f32[16,32], index: 3, kind: output, shape index: {}]
  %s4 = sld [smem:[#allocation0]]
  $region26: #{tpu_custom_call.1} parent=0
    _
  %s6 = ssub.s32 1, %s4
  %s7 = scalar_select 0, %s6, %s4
  $region1: #{tpu_custom_call.1} parent=0
    #allocation2 [shape = 'u8[8192]{0}', space=vmem, size = 0x2000, scoped, tag = 'input window, operand 0, single buffered']
    #allocation3 [shape = 's32[1]{0}', space=sflag, size = 0x4, scoped, tag = 'scoped memory for tpu_custom_call.1']
    #allocation4 [shape = 's32[1]{0}', space=sflag, size = 0x4, scoped, tag = 'scoped memory for tpu_custom_call.1']
    #allocation5 [shape = 'u8[8192]{0}', space=vmem, size = 0x2000, scoped, tag = 'output window, operand 0, single buffered']
    %8 = vsyncpa [#allocation3], 0
    %9 = vsyncpa [#allocation4], 0
    // Predicated region
    $region2: #{tpu_custom_call.1} parent=1 // pred_check
      _
    $region3: #{tpu_custom_call.1} parent=1 // pred_check_branch
      %11 = sbr.rel (0) target = $region5
    $region4: #{tpu_custom_call.1} parent=1 // pred_region
      %s13 = ssub.s32 256, 256
      %14 = vsyncadd [#allocation3], %s13
      %s15 = sshll.u32 [#allocation2], 4
      %s16 = int_to_ptr.vmem [resolvable:$true] %s15
      %21 = dma.hbm_to_vmem [thread:$0]  %s0, 256, %s16, [#allocation3], 128, 128, 8
    $region5: #{tpu_custom_call.1} parent=1 // pred_fallthru
      _
    // Predicated region
    $region6: #{tpu_custom_call.1} parent=1 // pred_check
      _
    $region7: #{tpu_custom_call.1} parent=1 // pred_check_branch
      %23 = sbr.rel (0) target = $region9
    $region8: #{tpu_custom_call.1} parent=1 // pred_region
      _
    $region9: #{tpu_custom_call.1} parent=1 // pred_fallthru
      _
    // Predicated region
    $region10: #{tpu_custom_call.1} parent=1 // pred_check
      _
    $region11: #{tpu_custom_call.1} parent=1 // pred_check_branch
      %25 = sbr.rel (0) target = $region13
    $region12: #{tpu_custom_call.1} parent=1 // pred_region
      _
    $region13: #{tpu_custom_call.1} parent=1 // pred_fallthru
      _
    // Predicated region
    $region14: #{tpu_custom_call.1} parent=1 // pred_check
      _
    $region15: #{tpu_custom_call.1} parent=1 // pred_check_branch
      %27 = sbr.rel (0) target = $region17
    $region16: #{tpu_custom_call.1} parent=1 // pred_region
      %28 = dma.done [#allocation3], 256
    $region17: #{tpu_custom_call.1} parent=1 // pred_fallthru
      _
    %v29 = vld [vmem:[#allocation2] sm:$0xff]
    %v30 = vld [vmem:[#allocation2 + $0x8] sm:$0xff]
    %vm31 = vcmask 261120
    %v32 = vsel %vm31, %v29, 0.0
    %33 = vadd.xlane.f32.xlu0 %v32
    %v34 = vpop.xlane.xlu0 %33
    %v35 = vsel %vm31, %v30, 0.0
    %36 = vadd.xlane.f32.xlu0 %v35
    %v37 = vpop.xlane.xlu0 %36
    %v38 = vmul.f32 %v34, 0.03125
    %v39 = vmul.f32 %v37, 0.03125
    %v40 = vsub.f32 %v29, %v38
    %v41 = vsub.f32 %v30, %v39
    %v42 = vmul.f32 %v40, %v40
    %v43 = vmul.f32 %v41, %v41
    %v44 = vsel %vm31, %v42, 0.0
    %45 = vadd.xlane.f32.xlu0 %v44
    %v46 = vpop.xlane.xlu0 %45
    %v47 = vsel %vm31, %v43, 0.0
    %48 = vadd.xlane.f32.xlu0 %v47
    %v49 = vpop.xlane.xlu0 %48
    %v50 = vmul.f32 %v46, 0.03125
    %v51 = vmul.f32 %v49, 0.03125
    %v52 = vadd.f32 %v50, 1e-05
    %v53 = vadd.f32 %v51, 1e-05
    %v54 = vrsqrt.pop %v52
    %v55 = vrsqrt.pop %v53
    %v56 = vld [vmem:[%s1] sm:$0x1]
    %v57 = vld [vmem:[%s2] sm:$0x1]
    %v58 = vmul.f32 %v40, %v54
    %v59 = vmul.f32 %v41, %v55
    %v61 = vlaneseq
    %v62 = vshrl.u32 %v61, 7
    %v63 = vsub.s32 0, %v62
    %v64 = vrot.slane %v56, %v63
    %v66 = vmul.f32 %v58, %v64
    %v67 = vmul.f32 %v59, %v64
    %v69 = vlaneseq
    %v70 = vshrl.u32 %v69, 7
    %v71 = vsub.s32 0, %v70
    %v72 = vrot.slane %v57, %v71
    %v74 = vadd.f32 %v66, %v72
    %v75 = vadd.f32 %v67, %v72
    %76 = vst.msk [vmem:[#allocation5] sm:$0xff] %vm31, %v74
    %77 = vst.msk [vmem:[#allocation5 + $0x8] sm:$0xff] %vm31, %v75
    // Predicated region
    $region18: #{tpu_custom_call.1} parent=1 // pred_check
      _
    $region19: #{tpu_custom_call.1} parent=1 // pred_check_branch
      %79 = sbr.rel (0) target = $region21
    $region20: #{tpu_custom_call.1} parent=1 // pred_region
      %s81 = ssub.s32 256, 256
      %82 = vsyncadd [#allocation4], %s81
      %s83 = sshll.u32 [#allocation5], 4
      %s84 = int_to_ptr.vmem [resolvable:$true] %s83
      %89 = dma.vmem_to_hbm [thread:$0]  %s84, 256, %s3, [#allocation4], 128, 128, 8
    $region21: #{tpu_custom_call.1} parent=1 // pred_fallthru
      _
    // Predicated region
    $region22: #{tpu_custom_call.1} parent=1 // pred_check
      _
    $region23: #{tpu_custom_call.1} parent=1 // pred_check_branch
      %91 = sbr.rel (0) target = $region25
    $region24: #{tpu_custom_call.1} parent=1 // pred_region
      %92 = dma.done [#allocation4], 256
    $region25: #{tpu_custom_call.1} parent=1 // pred_fallthru
      _
    %93 = vsyncpa [#allocation3], 1
    %94 = vsyncpa [#allocation4], 1

</llo_original>
